<compile_context>
chip_gen: v7x
topology: tpu7x:2x2x1
jax: 0.10.0
libtpu: 0.0.40
codegen_flags: <defaults>
</compile_context>

<pallas_src>
import math

import jax
import jax.numpy as jnp
from jax.experimental import pallas as pl
from jax.experimental.pallas import tpu as pltpu


def _layer_scale_kernel(x_ref, gamma_ref, o_ref):
    # x_ref: (tile_rows, tile_d); gamma_ref: (1, tile_d), broadcast over rows.
    x = x_ref[...].astype(jnp.float32)
    g = gamma_ref[...]  # float32
    o_ref[...] = (x * g).astype(o_ref.dtype)


def layer_scale(x: jax.Array, gamma: jax.Array, *, donate: bool = False,
                target_tile_bytes: int = 4 << 20) -> jax.Array:
    """Applies y = x * gamma with gamma broadcast along the last axis of x."""
    orig_shape = x.shape
    dim = int(orig_shape[-1]) if len(orig_shape) else 1
    assert gamma.shape == (dim,), f"gamma must have shape ({dim},)"

    # Zero-sized inputs: nothing to compute (reshape/fold below assumes size > 0).
    if x.size == 0:
        return x

    gamma32 = gamma.astype(jnp.float32)

    if not jnp.issubdtype(x.dtype, jnp.floating):
        # TODO(synk): integer inputs take a plain-JAX path (jnp promotion, matching
        # torch int*float -> float); the Pallas kernel below is float-only.
        return x * gamma32

    rows = 1
    for s in orig_shape[:-1]:
        rows *= int(s)
    rows = max(rows, 1)
    x2 = x.reshape(rows, dim)

    # Lane-density fold: if dim is not a multiple of 128, fold `fold` rows into
    # the lane axis so loads/stores are lane-dense (unmasked vst).  Fall back to
    # a partial fold (gcd) when the full fold does not divide the row count.
    fold = 1
    if dim % 128 != 0:
        k = 128 // math.gcd(dim, 128)
        fold = k if rows % k == 0 else max(1, math.gcd(rows, k))
    R = rows // fold
    D = dim * fold
    x2 = x2.reshape(R, D)
    gamma_row = jnp.tile(gamma32, fold).reshape(1, D)

    itemsize = jnp.dtype(x.dtype).itemsize
    pack = 8 * max(1, 4 // itemsize)  # sublane pack: 8 f32, 16 bf16, 32 int8/fp8

    # Feature-axis tiling: full width unless one packed row-group exceeds the
    # byte budget (keeps block DMAs fully contiguous in HBM).
    if D % 128 == 0 and pack * D * itemsize > target_tile_bytes:
        tile_d = max(128, (target_tile_bytes // (pack * itemsize)) // 128 * 128)
    else:
        tile_d = D  # full width (required anyway when D is not 128-aligned)

    # Row tiling: ~target_tile_bytes per x tile, multiple of the sublane pack.
    tile_rows = (target_tile_bytes // max(1, tile_d * itemsize)) // pack * pack
    tile_rows = max(pack, min(tile_rows, 8192))
    rows_ceil = -(-R // pack) * pack
    tile_rows = min(tile_rows, rows_ceil)

    # v7x megacore balance: prefer an even (>=2) row-block count when small so
    # both TensorCores get work.
    num_row_blocks = -(-R // tile_rows)
    if num_row_blocks % 2 == 1 and num_row_blocks < 8 and R > pack:
        cand = -(-(-(-R // (num_row_blocks + 1))) // pack) * pack
        cand = max(pack, cand)
        if (-(-R // cand)) % 2 == 0:
            tile_rows = cand

    # Feature axis outer, row axis inner: gamma block index constant across the
    # inner sweep (only matters when tile_d < D).
    grid = (pl.cdiv(D, tile_d), pl.cdiv(R, tile_rows))

    out = pl.pallas_call(
        _layer_scale_kernel,
        out_shape=jax.ShapeDtypeStruct((R, D), x.dtype),
        grid_spec=pltpu.PrefetchScalarGridSpec(
            num_scalar_prefetch=0,
            grid=grid,
            in_specs=[
                pl.BlockSpec((tile_rows, tile_d), lambda d, i: (i, d)),
                pl.BlockSpec((1, tile_d), lambda d, i: (0, d)),
            ],
            out_specs=pl.BlockSpec((tile_rows, tile_d), lambda d, i: (i, d)),
        ),
        compiler_params=pltpu.CompilerParams(
            dimension_semantics=("parallel", "parallel"),
            vmem_limit_bytes=32 * 1024 * 1024,
        ),
        # Blocks are disjoint and read-before-write, so aliasing x -> out is safe.
        input_output_aliases={0: 0} if donate else {},
    )(x2, gamma_row)

    return out.reshape(orig_shape)


class LayerScale:
    """JAX/Pallas port of the PyTorch LayerScale module."""

    def __init__(self, dim: int, init_values: float = 1e-5, inplace: bool = False):
        # `inplace` (torch x.mul_) -> donate x's HBM buffer to the output;
        # forward semantics are identical either way.
        self.inplace = inplace
        self.gamma = init_values * jnp.ones((dim,), dtype=jnp.float32)

    def __call__(self, x: jax.Array) -> jax.Array:
        return layer_scale(x, self.gamma, donate=self.inplace)


if __name__ == "__main__":
    key = jax.random.PRNGKey(0)

    # Narrow-dim case: exercises the lane-density fold (dim=32 -> 128 lanes).
    batch, seq, dim = 2, 8, 32
    x = jax.random.normal(key, (batch, seq, dim), dtype=jnp.float32)
    module = LayerScale(dim, init_values=1e-5)
    y_ref = x * module.gamma
    y = jax.block_until_ready(module(x))
    assert y.shape == x.shape
    assert jnp.allclose(y, y_ref, atol=1e-6, rtol=1e-6)

    # Ragged row count + bf16 input: masked partial block + f32-compute/cast path.
    x2 = jax.random.normal(jax.random.PRNGKey(1), (3, 5, 256), dtype=jnp.bfloat16)
    m2 = LayerScale(256, init_values=1e-5)
    y2_ref = (x2.astype(jnp.float32) * m2.gamma).astype(jnp.bfloat16)
    y2 = jax.block_until_ready(m2(x2))
    assert y2.shape == x2.shape
    assert jnp.allclose(y2.astype(jnp.float32), y2_ref.astype(jnp.float32),
                        atol=1e-6, rtol=1e-2)

    # inplace=True path: buffer donation + even row-block split (multi-block grid).
    x3 = jax.random.normal(jax.random.PRNGKey(2), (4, 64, 384), dtype=jnp.float32)
    m3 = LayerScale(384, init_values=1e-5, inplace=True)
    y3_ref = x3 * m3.gamma  # compute reference before donating x3's buffer
    y3 = jax.block_until_ready(m3(x3))
    assert y3.shape == (4, 64, 384)
    assert jnp.allclose(y3, y3_ref, atol=1e-6, rtol=1e-6)

    # Zero-sized input: early return, no kernel launch.
    x4 = jnp.zeros((0, 7, 32), dtype=jnp.float32)
    y4 = LayerScale(32)(x4)
    assert y4.shape == (0, 7, 32)

    print("KERNEL_OK")
</pallas_src>

<mosaic_0001>
module attributes {stable_mosaic.version = 11 : i64} {
  func.func @_layer_scale_kernel(%arg0: i32, %arg1: i32, %arg2: memref<8x128xf32, #tpu.memory_space<vmem>>, %arg3: memref<1x128xf32, #tpu.memory_space<vmem>>, %arg4: memref<8x128xf32, #tpu.memory_space<vmem>>) attributes {dimension_semantics = [#tpu.dimension_semantics<parallel>, #tpu.dimension_semantics<parallel>], iteration_bounds = array<i64: 1, 1>, scalar_prefetch = 0 : i64, scratch_operands = 0 : i64, tpu.core_type = #tpu.core_type<tc>, window_params = [{transform_indices = @transform_0, window_bounds = array<i64: 8, 128>}, {transform_indices = @transform_1, window_bounds = array<i64: 1, 128>}, {transform_indices = @transform_2, window_bounds = array<i64: 8, 128>}]} {
    %c0 = arith.constant 0 : index
    %c0_0 = arith.constant 0 : index
    %0 = vector.load %arg2[%c0, %c0_0] : memref<8x128xf32, #tpu.memory_space<vmem>>, vector<8x128xf32>
    %c0_1 = arith.constant 0 : index
    %c0_2 = arith.constant 0 : index
    %1 = vector.load %arg3[%c0_1, %c0_2] : memref<1x128xf32, #tpu.memory_space<vmem>>, vector<1x128xf32>
    %2 = vector.broadcast %1 : vector<1x128xf32> to vector<8x128xf32>
    %3 = arith.mulf %0, %2 : vector<8x128xf32>
    %c0_3 = arith.constant 0 : index
    %c0_4 = arith.constant 0 : index
    %4 = vector.load %arg4[%c0_3, %c0_4] : memref<8x128xf32, #tpu.memory_space<vmem>>, vector<8x128xf32>
    tpu.vector_store %arg4[%c0_3, %c0_4], %3 {strides = array<i32>} : memref<8x128xf32, #tpu.memory_space<vmem>>, vector<8x128xf32>,
    return
  }
  func.func @transform_0(%arg0: i32, %arg1: i32) -> (i32, i32) {
    %c0_i32 = arith.constant 0 : i32
    return %arg1, %arg0 : i32, i32
  }
  func.func @transform_1(%arg0: i32, %arg1: i32) -> (i32, i32) {
    %c0_i32 = arith.constant 0 : i32
    %c0_i32_0 = arith.constant 0 : i32
    return %c0_i32, %arg0 : i32, i32
  }
  func.func @transform_2(%arg0: i32, %arg1: i32) -> (i32, i32) {
    %c0_i32 = arith.constant 0 : i32
    return %arg1, %arg0 : i32, i32
  }
}

</mosaic_0001>

<llo_original>
// kernel: tpu_custom_call.1
$region0: #{tpu_custom_call.1}
  #allocation0 [shape = 'u32[]', space=smem, size = 0x4, offset = 0x4, fixed_abs, tag = 'smem constant byte address 0x4 - core index']
  #allocation1 [shape = 'u32[144,128]{1,0:T(1,128)}', space=vmem, size = 0x12000, scoped, tag = 'internal scratch']
  %s0 = inlined_call_operand.hbm [shape: f32[4,128], index: 0, kind: input, shape index: {}]
  %s1 = inlined_call_operand.vmem [shape: f32[1,128], index: 1, kind: input, shape index: {}]
  %s2 = inlined_call_operand.hbm [shape: f32[4,128], index: 2, kind: output, shape index: {}]
  %s3 = sld [smem:[#allocation0]]
  $region22: #{tpu_custom_call.1} parent=0
    _
  %s5 = ssub.s32 1, %s3
  %s6 = scalar_select 0, %s5, %s3
  $region1: #{tpu_custom_call.1} parent=0
    #allocation2 [shape = 'u8[4096]{0}', space=vmem, size = 0x1000, scoped, tag = 'input window, operand 0, single buffered']
    #allocation3 [shape = 's32[1]{0}', space=sflag, size = 0x4, scoped, tag = 'scoped memory for tpu_custom_call.1']
    #allocation4 [shape = 's32[1]{0}', space=sflag, size = 0x4, scoped, tag = 'scoped memory for tpu_custom_call.1']
    #allocation5 [shape = 'u8[4096]{0}', space=vmem, size = 0x1000, scoped, tag = 'output window, operand 0, single buffered']
    %7 = vsyncpa [#allocation3], 0
    %8 = vsyncpa [#allocation4], 0
    // Predicated region
    $region2: #{tpu_custom_call.1} parent=1 // pred_check
      _
    $region3: #{tpu_custom_call.1} parent=1 // pred_check_branch
      %10 = sbr.rel (0) target = $region5
    $region4: #{tpu_custom_call.1} parent=1 // pred_region
      %s12 = ssub.s32 128, 64
      %13 = vsyncadd [#allocation3], %s12
      %s14 = sshll.u32 [#allocation2], 4
      %s15 = int_to_ptr.vmem [resolvable:$true] %s14
      %20 = dma.hbm_to_vmem [thread:$0]  %s0, 64, %s15, [#allocation3], 64, 64, 4
    $region5: #{tpu_custom_call.1} parent=1 // pred_fallthru
      _
    // Predicated region
    $region6: #{tpu_custom_call.1} parent=1 // pred_check
      _
    $region7: #{tpu_custom_call.1} parent=1 // pred_check_branch
      %22 = sbr.rel (0) target = $region9
    $region8: #{tpu_custom_call.1} parent=1 // pred_region
      _
    $region9: #{tpu_custom_call.1} parent=1 // pred_fallthru
      _
    // Predicated region
    $region10: #{tpu_custom_call.1} parent=1 // pred_check
      _
    $region11: #{tpu_custom_call.1} parent=1 // pred_check_branch
      %24 = sbr.rel (0) target = $region13
    $region12: #{tpu_custom_call.1} parent=1 // pred_region
      %25 = dma.done [#allocation3], 128
    $region13: #{tpu_custom_call.1} parent=1 // pred_fallthru
      _
    %v26 = vld [vmem:[#allocation2] sm:$0xff]
    %v27 = vld [vmem:[%s1] sm:$0x1]
    %v29 = vlaneseq
    %v30 = vshrl.u32 %v29, 7
    %v31 = vsub.s32 0, %v30
    %v32 = vrot.slane %v27, %v31
    %v34 = vmul.f32 %v26, %v32
    %35 = vst [vmem:[#allocation5] sm:$0xff] %v34
    // Predicated region
    $region14: #{tpu_custom_call.1} parent=1 // pred_check
      _
    $region15: #{tpu_custom_call.1} parent=1 // pred_check_branch
      %37 = sbr.rel (0) target = $region17
    $region16: #{tpu_custom_call.1} parent=1 // pred_region
      %s39 = ssub.s32 128, 64
      %40 = vsyncadd [#allocation4], %s39
      %s41 = sshll.u32 [#allocation5], 4
      %s42 = int_to_ptr.vmem [resolvable:$true] %s41
      %47 = dma.vmem_to_hbm [thread:$0]  %s42, 64, %s2, [#allocation4], 64, 64, 4
    $region17: #{tpu_custom_call.1} parent=1 // pred_fallthru
      _
    // Predicated region
    $region18: #{tpu_custom_call.1} parent=1 // pred_check
      _
    $region19: #{tpu_custom_call.1} parent=1 // pred_check_branch
      %49 = sbr.rel (0) target = $region21
    $region20: #{tpu_custom_call.1} parent=1 // pred_region
      %50 = dma.done [#allocation4], 128
    $region21: #{tpu_custom_call.1} parent=1 // pred_fallthru
      _
    %51 = vsyncpa [#allocation3], 1
    %52 = vsyncpa [#allocation4], 1

</llo_original>
